<compile_context>
chip_gen: v5e
topology: v5e:2x2
jax: 0.10.0
libtpu: 0.0.40
codegen_flags: <defaults>
</compile_context>

<pallas_src>
import functools

import jax
import jax.numpy as jnp
import numpy as np
from jax import lax
from jax.experimental import pallas as pl
from jax.experimental.pallas import tpu as pltpu

HIDDEN_DIM = 64   # cfg.hidden_dim
DATA_DIM = 2      # cfg.data_dim
LANE = 128

_HIGHEST = jax.lax.Precision.HIGHEST
_DEFAULT = jax.lax.Precision.DEFAULT


def _round_up(n, m):
    return ((n + m - 1) // m) * m


# ----------------------------------------------------------------------------
# Kernels
# ----------------------------------------------------------------------------
def _scalar_t_kernel(x_ref, w1x_ref, c1_ref, w2_ref, b2_ref, out_ref,
                     *, chunk, act_dtype):
    """Scalar-t fast path.  Shapes (batch on lanes):
       x_ref (2, T), w1x_ref (H, 2), c1_ref (H, 1), w2_ref (2, H),
       b2_ref (2, 1), out_ref (2, T).
    """
    prec = _HIGHEST if act_dtype == jnp.float32 else _DEFAULT
    w1x = w1x_ref[...]
    c1 = c1_ref[...]
    w2 = w2_ref[...].astype(act_dtype)   # hoisted out of the chunk loop
    b2 = b2_ref[...]
    n_chunks = x_ref.shape[1] // chunk

    def body(c, carry):
        j = pl.multiple_of(c * chunk, chunk)
        x = x_ref[:, pl.ds(j, chunk)]                      # (2, chunk)
        # Layer 1: the whole time branch is pre-folded into c1 -> two VPU
        # broadcast FMAs + one tanh per hidden unit (no MXU work).
        z = w1x[:, 0:1] * x[0:1, :] + w1x[:, 1:2] * x[1:2, :] + c1
        h = jnp.tanh(z.astype(act_dtype))                  # (H, chunk)
        # Layer 2: (2,H) @ (H,chunk) -> lane-dense (2, chunk).
        out_ref[:, pl.ds(j, chunk)] = (
            jnp.dot(w2, h, preferred_element_type=jnp.float32, precision=prec)
            + b2)
        return carry

    lax.fori_loop(0, n_chunks, body, None, unroll=True)


def _batched_t_kernel(x_ref, t_ref, wt_ref, bt_ref, w1x_ref, w1t_ref, b1_ref,
                      w2_ref, b2_ref, out_ref, *, chunk, act_dtype):
    """Per-sample-t path.  Shapes (batch on lanes):
       x_ref (2, T), t_ref (1, T), wt/bt/b1 (H, 1), w1x (H, 2), w1t (H, H),
       w2 (2, H), b2 (2, 1), out_ref (2, T).
    """
    prec = _HIGHEST if act_dtype == jnp.float32 else _DEFAULT
    wt = wt_ref[...]
    bt = bt_ref[...]
    w1x = w1x_ref[...]
    w1t = w1t_ref[...].astype(act_dtype)
    b1 = b1_ref[...]
    w2 = w2_ref[...].astype(act_dtype)
    b2 = b2_ref[...]
    n_chunks = x_ref.shape[1] // chunk

    def body(c, carry):
        j = pl.multiple_of(c * chunk, chunk)
        x = x_ref[:, pl.ds(j, chunk)]                      # (2, chunk)
        t = t_ref[:, pl.ds(j, chunk)]                      # (1, chunk)
        # Time embedding Linear(1, H) + tanh: K=1 contraction is a VPU
        # broadcast multiply (never touches the MXU).
        te = jnp.tanh((wt * t + bt).astype(act_dtype))     # (H, chunk)
        # Layer 1 without materializing the concat: K=2 x-part on the VPU,
        # K=H te-part on the MXU with f32 accumulation.
        z = (w1x[:, 0:1] * x[0:1, :] + w1x[:, 1:2] * x[1:2, :]
             + jnp.dot(w1t, te, preferred_element_type=jnp.float32,
                       precision=prec)
             + b1)
        h = jnp.tanh(z.astype(act_dtype))                  # (H, chunk)
        out_ref[:, pl.ds(j, chunk)] = (
            jnp.dot(w2, h, preferred_element_type=jnp.float32, precision=prec)
            + b2)
        return carry

    lax.fori_loop(0, n_chunks, body, None, unroll=True)


# ----------------------------------------------------------------------------
# Wrapper
# ----------------------------------------------------------------------------
def diffusion_mlp_forward(x, t, params, *, tile_b=8192, bf16_activations=False):
    """x: (B, 2) f32;  t: python scalar, (), (1,) or (B,);  params: dict."""
    B = x.shape[0]
    H, D = HIDDEN_DIM, DATA_DIM
    p = params
    if B == 0:
        return jnp.zeros((0, D), jnp.float32)

    act_dtype = jnp.bfloat16 if bf16_activations else jnp.float32

    # Normalize t (matches the PyTorch scalar-broadcast logic); scalar-ness is
    # a static (shape-level) property, so the dispatch below is trace-safe.
    t_arr = jnp.asarray(t, dtype=jnp.float32).reshape(-1)
    scalar_t = (t_arr.shape[0] == 1)

    # --- tile / grid sizing -------------------------------------------------
    tile_b = max(int(tile_b), LANE)
    b_lanes = _round_up(B, LANE)
    tile = min(_round_up(tile_b, LANE), b_lanes)
    # Prefer >= 2 grid steps so the "parallel" batch axis can shard across the
    # two TensorCores of a v7x chip (no effect on 1-TC v5e / v6e).
    if b_lanes >= 2 * LANE:
        tile = min(tile, _round_up(pl.cdiv(b_lanes, 2), LANE))
    Bp = _round_up(B, tile)
    grid = (Bp // tile,)

    # In-kernel lane chunk: keep the (H, chunk) te/h temporaries small so they
    # don't stream through VMEM (v5e has a single vector-store slot).
    chunk = tile
    for c in (1024, 512, 256):
        if tile % c == 0:
            chunk = c
            break

    # --- lane-dense (feat, batch) inputs; pad only when needed --------------
    x_t = x.astype(jnp.float32).T                          # (D, B), fusable
    if Bp != B:
        x_t = jnp.pad(x_t, ((0, 0), (0, Bp - B)))

    def tiled(feat):
        return pl.BlockSpec((feat, tile), lambda i: (0, i))

    def resident(shape):
        return pl.BlockSpec(shape, lambda i: (0, 0))

    cparams = pltpu.CompilerParams(
        dimension_semantics=("parallel",),
        vmem_limit_bytes=32 * 1024 * 1024,
    )

    if scalar_t:
        # Fold the whole time branch and the only K=H matmul into a constant
        # column: c1 = w1t @ tanh(wt * t + bt) + b1  (H, 1).  Halves the EUP
        # (tanh) work per element and removes the t DMA entirely.
        te0 = jnp.tanh(p["wt"] * t_arr[0] + p["bt"])                   # (H, 1)
        c1 = jnp.dot(p["w1t"], te0, precision=_HIGHEST) + p["b1"]      # (H, 1)
        cost = pl.CostEstimate(
            flops=Bp * (4 * H + 2 * D * H),
            transcendentals=H * Bp,
            bytes_accessed=4 * (2 * Bp * D + H * (D + 1) + D * (H + 1)),
        )
        kernel = functools.partial(_scalar_t_kernel, chunk=chunk,
                                   act_dtype=act_dtype)
        out_t = pl.pallas_call(
            kernel,
            out_shape=jax.ShapeDtypeStruct((D, Bp), jnp.float32),
            grid=grid,
            in_specs=[
                tiled(D),             # x   (2, Bp)
                resident((H, D)),     # w1x
                resident((H, 1)),     # c1
                resident((D, H)),     # w2
                resident((D, 1)),     # b2
            ],
            out_specs=tiled(D),
            compiler_params=cparams,
            cost_estimate=cost,
        )(x_t, p["w1x"], c1, p["w2"], p["b2"])
    else:
        t_t = t_arr.reshape(1, B)
        if Bp != B:
            t_t = jnp.pad(t_t, ((0, 0), (0, Bp - B)))
        n_param = H + H + H * D + H * H + H + D * H + D
        cost = pl.CostEstimate(
            flops=2 * Bp * (H + H * (D + H) + D * H),
            transcendentals=2 * H * Bp,
            bytes_accessed=4 * (Bp * (2 * D + 1) + n_param),
        )
        kernel = functools.partial(_batched_t_kernel, chunk=chunk,
                                   act_dtype=act_dtype)
        out_t = pl.pallas_call(
            kernel,
            out_shape=jax.ShapeDtypeStruct((D, Bp), jnp.float32),
            grid=grid,
            in_specs=[
                tiled(D),             # x   (2, Bp)
                tiled(1),             # t   (1, Bp)
                resident((H, 1)),     # wt
                resident((H, 1)),     # bt
                resident((H, D)),     # w1x
                resident((H, H)),     # w1t
                resident((H, 1)),     # b1
                resident((D, H)),     # w2
                resident((D, 1)),     # b2
            ],
            out_specs=tiled(D),
            compiler_params=cparams,
            cost_estimate=cost,
        )(x_t, t_t, p["wt"], p["bt"], p["w1x"], p["w1t"], p["b1"],
          p["w2"], p["b2"])

    return out_t[:, :B].T


# ----------------------------------------------------------------------------
# Parameters / reference
# ----------------------------------------------------------------------------
def init_params(key):
    """Deterministic synthetic parameters in PyTorch (out, in) layout, with W1
    pre-split into its x-part (H,2) and te-part (H,H)."""
    ks = jax.random.split(key, 6)
    H, D = HIDDEN_DIM, DATA_DIM
    return {
        # time_embed: nn.Linear(1, H)
        "wt": jax.random.normal(ks[0], (H, 1), jnp.float32) * 0.5,
        "bt": jax.random.normal(ks[1], (H, 1), jnp.float32) * 0.1,
        # mlp layer 1: nn.Linear(2 + H, H), split column-wise
        "w1x": jax.random.normal(ks[2], (H, D), jnp.float32) * 0.3,
        "w1t": jax.random.normal(ks[3], (H, H), jnp.float32) * 0.1,
        "b1": jax.random.normal(ks[4], (H, 1), jnp.float32) * 0.1,
        # mlp layer 2: nn.Linear(H, 2)
        "w2": jax.random.normal(ks[5], (D, H), jnp.float32) * 0.2,
        "b2": jnp.zeros((D, 1), jnp.float32),
    }


def reference_forward(x, t, p):
    """Pure-JAX reference with the exact PyTorch module structure."""
    B = x.shape[0]
    t = jnp.asarray(t, jnp.float32).reshape(-1)
    if t.shape[0] == 1:
        t = jnp.broadcast_to(t, (B,))
    t = t.reshape(B, 1)
    te = jnp.tanh(
        jnp.dot(t, p["wt"].T, precision=_HIGHEST) + p["bt"].T)        # (B, H)
    inp = jnp.concatenate([x, te], axis=1)                            # (B, 2+H)
    w1 = jnp.concatenate([p["w1x"], p["w1t"]], axis=1)                # (H, 2+H)
    h = jnp.tanh(jnp.dot(inp, w1.T, precision=_HIGHEST) + p["b1"].T)  # (B, H)
    return jnp.dot(h, p["w2"].T, precision=_HIGHEST) + p["b2"].T      # (B, 2)


if __name__ == "__main__":
    key = jax.random.PRNGKey(0)
    k_param, k_x, k_t, k_x2, k_t2 = jax.random.split(key, 5)
    params = init_params(k_param)

    # Test 1: small batch, per-sample t (batched-t kernel, single tile).
    B = 8
    x = jax.random.normal(k_x, (B, DATA_DIM), jnp.float32)
    t = jax.random.uniform(k_t, (B,), jnp.float32)
    out = jax.block_until_ready(diffusion_mlp_forward(x, t, params))
    ref = reference_forward(x, t, params)
    np.testing.assert_allclose(np.asarray(out), np.asarray(ref),
                               rtol=1e-5, atol=1e-5)
    assert out.shape == (B, DATA_DIM)

    # Test 2: scalar t (fast path), B not a multiple of the tile -> multi-step
    # grid with zero-padded remainder.
    B2 = 300
    x2 = jax.random.normal(k_x2, (B2, DATA_DIM), jnp.float32)
    t2 = 0.37
    out2 = jax.block_until_ready(
        diffusion_mlp_forward(x2, t2, params, tile_b=128))
    ref2 = reference_forward(x2, t2, params)
    np.testing.assert_allclose(np.asarray(out2), np.asarray(ref2),
                               rtol=1e-5, atol=1e-5)
    assert out2.shape == (B2, DATA_DIM)

    # Test 3: bf16 activation path (v6e/v7x EUP), per-sample t, default tiling
    # (>= 2 grid steps), looser tolerance.
    t3 = jax.random.uniform(k_t2, (B2,), jnp.float32)
    out3 = jax.block_until_ready(
        diffusion_mlp_forward(x2, t3, params, bf16_activations=True))
    ref3 = reference_forward(x2, t3, params)
    np.testing.assert_allclose(np.asarray(out3), np.asarray(ref3),
                               rtol=1e-1, atol=1e-1)
    assert out3.shape == (B2, DATA_DIM)

    print("KERNEL_OK")
</pallas_src>

<mosaic_0001>
module attributes {stable_mosaic.version = 11 : i64} {
  func.func @_batched_t_kernel(%arg0: i32, %arg1: memref<2x128xf32, #tpu.memory_space<vmem>>, %arg2: memref<1x128xf32, #tpu.memory_space<vmem>>, %arg3: memref<64x1xf32, #tpu.memory_space<vmem>>, %arg4: memref<64x1xf32, #tpu.memory_space<vmem>>, %arg5: memref<64x2xf32, #tpu.memory_space<vmem>>, %arg6: memref<64x64xf32, #tpu.memory_space<vmem>>, %arg7: memref<64x1xf32, #tpu.memory_space<vmem>>, %arg8: memref<2x64xf32, #tpu.memory_space<vmem>>, %arg9: memref<2x1xf32, #tpu.memory_space<vmem>>, %arg10: memref<2x128xf32, #tpu.memory_space<vmem>>) attributes {dimension_semantics = [#tpu.dimension_semantics<parallel>], iteration_bounds = array<i64: 1>, scalar_prefetch = 0 : i64, scratch_operands = 0 : i64, tpu.core_type = #tpu.core_type<tc>, window_params = [{transform_indices = @transform_0, window_bounds = array<i64: 2, 128>}, {transform_indices = @transform_1, window_bounds = array<i64: 1, 128>}, {pipeline_mode = #tpu.pipeline_mode<synchronous>, transform_indices = @transform_2, window_bounds = array<i64: 64, 1>}, {pipeline_mode = #tpu.pipeline_mode<synchronous>, transform_indices = @transform_3, window_bounds = array<i64: 64, 1>}, {pipeline_mode = #tpu.pipeline_mode<synchronous>, transform_indices = @transform_4, window_bounds = array<i64: 64, 2>}, {pipeline_mode = #tpu.pipeline_mode<synchronous>, transform_indices = @transform_5, window_bounds = array<i64: 64, 64>}, {pipeline_mode = #tpu.pipeline_mode<synchronous>, transform_indices = @transform_6, window_bounds = array<i64: 64, 1>}, {pipeline_mode = #tpu.pipeline_mode<synchronous>, transform_indices = @transform_7, window_bounds = array<i64: 2, 64>}, {pipeline_mode = #tpu.pipeline_mode<synchronous>, transform_indices = @transform_8, window_bounds = array<i64: 2, 1>}, {transform_indices = @transform_9, window_bounds = array<i64: 2, 128>}]} {
    %c0 = arith.constant 0 : index
    %c0_0 = arith.constant 0 : index
    %0 = vector.load %arg3[%c0, %c0_0] : memref<64x1xf32, #tpu.memory_space<vmem>>, vector<64x1xf32>
    %c0_1 = arith.constant 0 : index
    %c0_2 = arith.constant 0 : index
    %1 = vector.load %arg4[%c0_1, %c0_2] : memref<64x1xf32, #tpu.memory_space<vmem>>, vector<64x1xf32>
    %c0_3 = arith.constant 0 : index
    %c0_4 = arith.constant 0 : index
    %2 = vector.load %arg5[%c0_3, %c0_4] : memref<64x2xf32, #tpu.memory_space<vmem>>, vector<64x2xf32>
    %c0_5 = arith.constant 0 : index
    %c0_6 = arith.constant 0 : index
    %3 = vector.load %arg6[%c0_5, %c0_6] : memref<64x64xf32, #tpu.memory_space<vmem>>, vector<64x64xf32>
    %c0_7 = arith.constant 0 : index
    %c0_8 = arith.constant 0 : index
    %4 = vector.load %arg7[%c0_7, %c0_8] : memref<64x1xf32, #tpu.memory_space<vmem>>, vector<64x1xf32>
    %c0_9 = arith.constant 0 : index
    %c0_10 = arith.constant 0 : index
    %5 = vector.load %arg8[%c0_9, %c0_10] : memref<2x64xf32, #tpu.memory_space<vmem>>, vector<2x64xf32>
    %c0_11 = arith.constant 0 : index
    %c0_12 = arith.constant 0 : index
    %6 = vector.load %arg9[%c0_11, %c0_12] : memref<2x1xf32, #tpu.memory_space<vmem>>, vector<2x1xf32>
    %c0_i32 = arith.constant 0 : i32
    %c128_i32 = arith.constant 128 : i32
    %7 = arith.muli %c0_i32, %c128_i32 : i32
    %8 = tpu.assume_multiple %7, 128 : i32
    %c0_13 = arith.constant 0 : index
    %9 = arith.index_cast %8 : i32 to index
    %10 = vector.load %arg1[%c0_13, %9] : memref<2x128xf32, #tpu.memory_space<vmem>>, vector<2x128xf32>
    %c0_14 = arith.constant 0 : index
    %11 = arith.index_cast %8 : i32 to index
    %12 = vector.load %arg2[%c0_14, %11] : memref<1x128xf32, #tpu.memory_space<vmem>>, vector<1x128xf32>
    %13 = vector.broadcast %0 : vector<64x1xf32> to vector<64x128xf32>
    %14 = vector.broadcast %12 : vector<1x128xf32> to vector<64x128xf32>
    %15 = arith.mulf %13, %14 : vector<64x128xf32>
    %16 = vector.broadcast %1 : vector<64x1xf32> to vector<64x128xf32>
    %17 = arith.addf %15, %16 : vector<64x128xf32>
    %18 = math.tanh %17 : vector<64x128xf32>
    %19 = vector.extract_strided_slice %2 {offsets = [0, 0], sizes = [64, 1], strides = [1, 1]} : vector<64x2xf32> to vector<64x1xf32>
    %20 = vector.extract_strided_slice %10 {offsets = [0, 0], sizes = [1, 128], strides = [1, 1]} : vector<2x128xf32> to vector<1x128xf32>
    %21 = vector.broadcast %19 : vector<64x1xf32> to vector<64x128xf32>
    %22 = vector.broadcast %20 : vector<1x128xf32> to vector<64x128xf32>
    %23 = arith.mulf %21, %22 : vector<64x128xf32>
    %24 = vector.extract_strided_slice %2 {offsets = [0, 1], sizes = [64, 1], strides = [1, 1]} : vector<64x2xf32> to vector<64x1xf32>
    %25 = vector.extract_strided_slice %10 {offsets = [1, 0], sizes = [1, 128], strides = [1, 1]} : vector<2x128xf32> to vector<1x128xf32>
    %26 = vector.broadcast %24 : vector<64x1xf32> to vector<64x128xf32>
    %27 = vector.broadcast %25 : vector<1x128xf32> to vector<64x128xf32>
    %28 = arith.mulf %26, %27 : vector<64x128xf32>
    %29 = arith.addf %23, %28 : vector<64x128xf32>
    %cst = arith.constant dense<0.000000e+00> : vector<64x128xf32>
    %30 = tpu.matmul %3, %18, %cst {dimension_numbers = #tpu.dot_dimension_numbers<[1], [0], [0], [1], [0, 0, 1, 1], [], []>, precision = #tpu.contract_precision<fp32>} : vector<64x64xf32>, vector<64x128xf32>, vector<64x128xf32> -> vector<64x128xf32>
    %31 = arith.addf %29, %30 : vector<64x128xf32>
    %32 = vector.broadcast %4 : vector<64x1xf32> to vector<64x128xf32>
    %33 = arith.addf %31, %32 : vector<64x128xf32>
    %34 = math.tanh %33 : vector<64x128xf32>
    %cst_15 = arith.constant dense<0.000000e+00> : vector<2x128xf32>
    %35 = tpu.matmul %5, %34, %cst_15 {dimension_numbers = #tpu.dot_dimension_numbers<[1], [0], [0], [1], [0, 0, 1, 1], [], []>, precision = #tpu.contract_precision<fp32>} : vector<2x64xf32>, vector<64x128xf32>, vector<2x128xf32> -> vector<2x128xf32>
    %36 = vector.broadcast %6 : vector<2x1xf32> to vector<2x128xf32>
    %37 = arith.addf %35, %36 : vector<2x128xf32>
    %c0_16 = arith.constant 0 : index
    %38 = arith.index_cast %8 : i32 to index
    %39 = vector.load %arg10[%c0_16, %38] : memref<2x128xf32, #tpu.memory_space<vmem>>, vector<2x128xf32>
    tpu.vector_store %arg10[%c0_16, %38], %37 {strides = array<i32>} : memref<2x128xf32, #tpu.memory_space<vmem>>, vector<2x128xf32>,
    %c1_i32 = arith.constant 1 : i32
    return
  }
  func.func @transform_0(%arg0: i32) -> (i32, i32) {
    %c0_i32 = arith.constant 0 : i32
    %c0_i32_0 = arith.constant 0 : i32
    return %c0_i32, %arg0 : i32, i32
  }
  func.func @transform_1(%arg0: i32) -> (i32, i32) {
    %c0_i32 = arith.constant 0 : i32
    %c0_i32_0 = arith.constant 0 : i32
    return %c0_i32, %arg0 : i32, i32
  }
  func.func @transform_2(%arg0: i32) -> (i32, i32) {
    %c0_i32 = arith.constant 0 : i32
    %c0_i32_0 = arith.constant 0 : i32
    %c0_i32_1 = arith.constant 0 : i32
    return %c0_i32, %c0_i32_0 : i32, i32
  }
  func.func @transform_3(%arg0: i32) -> (i32, i32) {
    %c0_i32 = arith.constant 0 : i32
    %c0_i32_0 = arith.constant 0 : i32
    %c0_i32_1 = arith.constant 0 : i32
    return %c0_i32, %c0_i32_0 : i32, i32
  }
  func.func @transform_4(%arg0: i32) -> (i32, i32) {
    %c0_i32 = arith.constant 0 : i32
    %c0_i32_0 = arith.constant 0 : i32
    %c0_i32_1 = arith.constant 0 : i32
    return %c0_i32, %c0_i32_0 : i32, i32
  }
  func.func @transform_5(%arg0: i32) -> (i32, i32) {
    %c0_i32 = arith.constant 0 : i32
    %c0_i32_0 = arith.constant 0 : i32
    %c0_i32_1 = arith.constant 0 : i32
    return %c0_i32, %c0_i32_0 : i32, i32
  }
  func.func @transform_6(%arg0: i32) -> (i32, i32) {
    %c0_i32 = arith.constant 0 : i32
    %c0_i32_0 = arith.constant 0 : i32
    %c0_i32_1 = arith.constant 0 : i32
    return %c0_i32, %c0_i32_0 : i32, i32
  }
  func.func @transform_7(%arg0: i32) -> (i32, i32) {
    %c0_i32 = arith.constant 0 : i32
    %c0_i32_0 = arith.constant 0 : i32
    %c0_i32_1 = arith.constant 0 : i32
    return %c0_i32, %c0_i32_0 : i32, i32
  }
  func.func @transform_8(%arg0: i32) -> (i32, i32) {
    %c0_i32 = arith.constant 0 : i32
    %c0_i32_0 = arith.constant 0 : i32
    %c0_i32_1 = arith.constant 0 : i32
    return %c0_i32, %c0_i32_0 : i32, i32
  }
  func.func @transform_9(%arg0: i32) -> (i32, i32) {
    %c0_i32 = arith.constant 0 : i32
    %c0_i32_0 = arith.constant 0 : i32
    return %c0_i32, %arg0 : i32, i32
  }
}

</mosaic_0001>

<llo_original>
// kernel: tpu_custom_call.1
$region0: #{tpu_custom_call.1}
  #allocation0 [shape = 'u32[]', space=smem, size = 0x4, offset = 0x4, fixed_abs, tag = 'smem constant byte address 0x4 - core index']
  #allocation1 [shape = 'u32[72,128]{1,0:T(1,128)}', space=vmem, size = 0x9000, scoped, tag = 'internal scratch']
  %s0 = inlined_call_operand.vmem [shape: f32[2,128], index: 0, kind: input, shape index: {}]
  %s1 = inlined_call_operand.vmem [shape: f32[1,128], index: 1, kind: input, shape index: {}]
  %s2 = inlined_call_operand.vmem [shape: f32[64,1], index: 2, kind: input, shape index: {}]
  %s3 = inlined_call_operand.vmem [shape: f32[64,1], index: 3, kind: input, shape index: {}]
  %s4 = inlined_call_operand.vmem [shape: f32[64,2], index: 4, kind: input, shape index: {}]
  %s5 = inlined_call_operand.vmem [shape: f32[64,64], index: 5, kind: input, shape index: {}]
  %s6 = inlined_call_operand.vmem [shape: f32[64,1], index: 6, kind: input, shape index: {}]
  %s7 = inlined_call_operand.vmem [shape: f32[2,64], index: 7, kind: input, shape index: {}]
  %s8 = inlined_call_operand.vmem [shape: f32[2,1], index: 8, kind: input, shape index: {}]
  %s9 = inlined_call_operand.hbm [shape: f32[2,128], index: 9, kind: output, shape index: {}]
  %s10 = sld [smem:[#allocation0]]
  $region46: #{tpu_custom_call.1} parent=0
    _
  %s12 = ssub.s32 1, %s10
  %s13 = scalar_select 0, %s12, %s10
  $region1: #{tpu_custom_call.1} parent=0
    #allocation2 [shape = 'u8[1024]{0}', space=vmem, size = 0x400, scoped, tag = 'output window, operand 0, single buffered']
    #allocation3 [shape = 's32[1]{0}', space=sflag, size = 0x4, scoped, tag = 'scoped memory for tpu_custom_call.1']
    %14 = vsyncpa [#allocation3], 0
    // Predicated region
    $region2: #{tpu_custom_call.1} parent=1 // pred_check
      _
    $region3: #{tpu_custom_call.1} parent=1 // pred_check_branch
      %16 = sbr.rel (0) target = $region5
    $region4: #{tpu_custom_call.1} parent=1 // pred_region
      _
    $region5: #{tpu_custom_call.1} parent=1 // pred_fallthru
      _
    // Predicated region
    $region6: #{tpu_custom_call.1} parent=1 // pred_check
      _
    $region7: #{tpu_custom_call.1} parent=1 // pred_check_branch
      %18 = sbr.rel (0) target = $region9
    $region8: #{tpu_custom_call.1} parent=1 // pred_region
      _
    $region9: #{tpu_custom_call.1} parent=1 // pred_fallthru
      _
    // Predicated region
    $region10: #{tpu_custom_call.1} parent=1 // pred_check
      _
    $region11: #{tpu_custom_call.1} parent=1 // pred_check_branch
      %20 = sbr.rel (0) target = $region13
    $region12: #{tpu_custom_call.1} parent=1 // pred_region
      _
    $region13: #{tpu_custom_call.1} parent=1 // pred_fallthru
      _
    // Predicated region
    $region14: #{tpu_custom_call.1} parent=1 // pred_check
      _
    $region15: #{tpu_custom_call.1} parent=1 // pred_check_branch
      %22 = sbr.rel (0) target = $region17
    $region16: #{tpu_custom_call.1} parent=1 // pred_region
      _
    $region17: #{tpu_custom_call.1} parent=1 // pred_fallthru
      _
    // Predicated region
    $region18: #{tpu_custom_call.1} parent=1 // pred_check
      _
    $region19: #{tpu_custom_call.1} parent=1 // pred_check_branch
      %24 = sbr.rel (0) target = $region21
    $region20: #{tpu_custom_call.1} parent=1 // pred_region
      _
    $region21: #{tpu_custom_call.1} parent=1 // pred_fallthru
      _
    // Predicated region
    $region22: #{tpu_custom_call.1} parent=1 // pred_check
      _
    $region23: #{tpu_custom_call.1} parent=1 // pred_check_branch
      %26 = sbr.rel (0) target = $region25
    $region24: #{tpu_custom_call.1} parent=1 // pred_region
      _
    $region25: #{tpu_custom_call.1} parent=1 // pred_fallthru
      _
    // Predicated region
    $region26: #{tpu_custom_call.1} parent=1 // pred_check
      _
    $region27: #{tpu_custom_call.1} parent=1 // pred_check_branch
      %28 = sbr.rel (0) target = $region29
    $region28: #{tpu_custom_call.1} parent=1 // pred_region
      _
    $region29: #{tpu_custom_call.1} parent=1 // pred_fallthru
      _
    // Predicated region
    $region30: #{tpu_custom_call.1} parent=1 // pred_check
      _
    $region31: #{tpu_custom_call.1} parent=1 // pred_check_branch
      %30 = sbr.rel (0) target = $region33
    $region32: #{tpu_custom_call.1} parent=1 // pred_region
      _
    $region33: #{tpu_custom_call.1} parent=1 // pred_fallthru
      _
    // Predicated region
    $region34: #{tpu_custom_call.1} parent=1 // pred_check
      _
    $region35: #{tpu_custom_call.1} parent=1 // pred_check_branch
      %32 = sbr.rel (0) target = $region37
    $region36: #{tpu_custom_call.1} parent=1 // pred_region
      _
    $region37: #{tpu_custom_call.1} parent=1 // pred_fallthru
      _
    %v33 = vld [vmem:[%s2] sm:$0xff]
    %v34 = vld [vmem:[%s2 + $0x8] sm:$0xff]
    %v35 = vld [vmem:[%s2 + $0x10] sm:$0xff]
    %v36 = vld [vmem:[%s2 + $0x18] sm:$0xff]
    %v37 = vld [vmem:[%s2 + $0x20] sm:$0xff]
    %v38 = vld [vmem:[%s2 + $0x28] sm:$0xff]
    %v39 = vld [vmem:[%s2 + $0x30] sm:$0xff]
    %v40 = vld [vmem:[%s2 + $0x38] sm:$0xff]
    %v41 = vld [vmem:[%s3] sm:$0xff]
    %v42 = vld [vmem:[%s3 + $0x8] sm:$0xff]
    %v43 = vld [vmem:[%s3 + $0x10] sm:$0xff]
    %v44 = vld [vmem:[%s3 + $0x18] sm:$0xff]
    %v45 = vld [vmem:[%s3 + $0x20] sm:$0xff]
    %v46 = vld [vmem:[%s3 + $0x28] sm:$0xff]
    %v47 = vld [vmem:[%s3 + $0x30] sm:$0xff]
    %v48 = vld [vmem:[%s3 + $0x38] sm:$0xff]
    %v49 = vld [vmem:[%s4] sm:$0xff]
    %v50 = vld [vmem:[%s4 + $0x8] sm:$0xff]
    %v51 = vld [vmem:[%s4 + $0x10] sm:$0xff]
    %v52 = vld [vmem:[%s4 + $0x18] sm:$0xff]
    %v53 = vld [vmem:[%s4 + $0x20] sm:$0xff]
    %v54 = vld [vmem:[%s4 + $0x28] sm:$0xff]
    %v55 = vld [vmem:[%s4 + $0x30] sm:$0xff]
    %v56 = vld [vmem:[%s4 + $0x38] sm:$0xff]
    %v57 = vld [vmem:[%s5] sm:$0xff]
    %v58 = vld [vmem:[%s5 + $0x8] sm:$0xff]
    %v59 = vld [vmem:[%s5 + $0x10] sm:$0xff]
    %v60 = vld [vmem:[%s5 + $0x18] sm:$0xff]
    %v61 = vld [vmem:[%s5 + $0x20] sm:$0xff]
    %v62 = vld [vmem:[%s5 + $0x28] sm:$0xff]
    %v63 = vld [vmem:[%s5 + $0x30] sm:$0xff]
    %v64 = vld [vmem:[%s5 + $0x38] sm:$0xff]
    %v65 = vld [vmem:[%s6] sm:$0xff]
    %v66 = vld [vmem:[%s6 + $0x8] sm:$0xff]
    %v67 = vld [vmem:[%s6 + $0x10] sm:$0xff]
    %v68 = vld [vmem:[%s6 + $0x18] sm:$0xff]
    %v69 = vld [vmem:[%s6 + $0x20] sm:$0xff]
    %v70 = vld [vmem:[%s6 + $0x28] sm:$0xff]
    %v71 = vld [vmem:[%s6 + $0x30] sm:$0xff]
    %v72 = vld [vmem:[%s6 + $0x38] sm:$0xff]
    %v73 = vld [vmem:[%s7] sm:$0x3]
    %v74 = vld [vmem:[%s8] sm:$0x3]
    %v75 = vld [vmem:[%s0] sm:$0x3]
    %v76 = vld [vmem:[%s1] sm:$0x1]
    %78 = vset.pattern.permute.xlu0 0
    %79 = vperm.xlu0 %78, %v33
    %v80 = vpop.permute.xlu0 %79
    %83 = vset.pattern.permute.xlu0 0
    %84 = vperm.xlu0 %83, %v34
    %v85 = vpop.permute.xlu0 %84
    %88 = vset.pattern.permute.xlu0 0
    %89 = vperm.xlu0 %88, %v35
    %v90 = vpop.permute.xlu0 %89
    %93 = vset.pattern.permute.xlu0 0
    %94 = vperm.xlu0 %93, %v36
    %v95 = vpop.permute.xlu0 %94
    %98 = vset.pattern.permute.xlu0 0
    %99 = vperm.xlu0 %98, %v37
    %v100 = vpop.permute.xlu0 %99
    %103 = vset.pattern.permute.xlu0 0
    %104 = vperm.xlu0 %103, %v38
    %v105 = vpop.permute.xlu0 %104
    %108 = vset.pattern.permute.xlu0 0
    %109 = vperm.xlu0 %108, %v39
    %v110 = vpop.permute.xlu0 %109
    %113 = vset.pattern.permute.xlu0 0
    %114 = vperm.xlu0 %113, %v40
    %v115 = vpop.permute.xlu0 %114
    %v118 = vperm.slane %v76, 0
    %v120 = vmul.f32 %v80, %v118
    %v121 = vmul.f32 %v85, %v118
    %v122 = vmul.f32 %v90, %v118
    %v123 = vmul.f32 %v95, %v118
    %v124 = vmul.f32 %v100, %v118
    %v125 = vmul.f32 %v105, %v118
    %v126 = vmul.f32 %v110, %v118
    %v127 = vmul.f32 %v115, %v118
    %129 = vset.pattern.permute.xlu0 0
    %130 = vperm.xlu0 %129, %v41
    %v131 = vpop.permute.xlu0 %130
    %134 = vset.pattern.permute.xlu0 0
    %135 = vperm.xlu0 %134, %v42
    %v136 = vpop.permute.xlu0 %135
    %139 = vset.pattern.permute.xlu0 0
    %140 = vperm.xlu0 %139, %v43
    %v141 = vpop.permute.xlu0 %140
    %144 = vset.pattern.permute.xlu0 0
    %145 = vperm.xlu0 %144, %v44
    %v146 = vpop.permute.xlu0 %145
    %149 = vset.pattern.permute.xlu0 0
    %150 = vperm.xlu0 %149, %v45
    %v151 = vpop.permute.xlu0 %150
    %154 = vset.pattern.permute.xlu0 0
    %155 = vperm.xlu0 %154, %v46
    %v156 = vpop.permute.xlu0 %155
    %159 = vset.pattern.permute.xlu0 0
    %160 = vperm.xlu0 %159, %v47
    %v161 = vpop.permute.xlu0 %160
    %164 = vset.pattern.permute.xlu0 0
    %165 = vperm.xlu0 %164, %v48
    %v166 = vpop.permute.xlu0 %165
    %v168 = vadd.f32 %v120, %v131
    %v169 = vadd.f32 %v121, %v136
    %v170 = vadd.f32 %v122, %v141
    %v171 = vadd.f32 %v123, %v146
    %v172 = vadd.f32 %v124, %v151
    %v173 = vadd.f32 %v125, %v156
    %v174 = vadd.f32 %v126, %v161
    %v175 = vadd.f32 %v127, %v166
    %v176 = vtanh.pop %v168
    %v177 = vtanh.pop %v169
    %v178 = vtanh.pop %v170
    %v179 = vtanh.pop %v171
    %v180 = vtanh.pop %v172
    %v181 = vtanh.pop %v173
    %v182 = vtanh.pop %v174
    %v183 = vtanh.pop %v175
    %185 = vset.pattern.permute.xlu0 0
    %186 = vperm.xlu0 %185, %v49
    %v187 = vpop.permute.xlu0 %186
    %190 = vset.pattern.permute.xlu0 0
    %191 = vperm.xlu0 %190, %v50
    %v192 = vpop.permute.xlu0 %191
    %195 = vset.pattern.permute.xlu0 0
    %196 = vperm.xlu0 %195, %v51
    %v197 = vpop.permute.xlu0 %196
    %200 = vset.pattern.permute.xlu0 0
    %201 = vperm.xlu0 %200, %v52
    %v202 = vpop.permute.xlu0 %201
    %205 = vset.pattern.permute.xlu0 0
    %206 = vperm.xlu0 %205, %v53
    %v207 = vpop.permute.xlu0 %206
    %210 = vset.pattern.permute.xlu0 0
    %211 = vperm.xlu0 %210, %v54
    %v212 = vpop.permute.xlu0 %211
    %215 = vset.pattern.permute.xlu0 0
    %216 = vperm.xlu0 %215, %v55
    %v217 = vpop.permute.xlu0 %216
    %220 = vset.pattern.permute.xlu0 0
    %221 = vperm.xlu0 %220, %v56
    %v222 = vpop.permute.xlu0 %221
    %v224 = vperm.slane %v75, 0
    %v225 = vmul.f32 %v187, %v224
    %v226 = vmul.f32 %v192, %v224
    %v227 = vmul.f32 %v197, %v224
    %v228 = vmul.f32 %v202, %v224
    %v229 = vmul.f32 %v207, %v224
    %v230 = vmul.f32 %v212, %v224
    %v231 = vmul.f32 %v217, %v224
    %v232 = vmul.f32 %v222, %v224
    %233 = vset.pattern.permute.xlu0 1
    %234 = vperm.xlu0 %233, %v49
    %v235 = vpop.permute.xlu0 %234
    %237 = vset.pattern.permute.xlu0 1
    %238 = vperm.xlu0 %237, %v50
    %v239 = vpop.permute.xlu0 %238
    %241 = vset.pattern.permute.xlu0 1
    %242 = vperm.xlu0 %241, %v51
    %v243 = vpop.permute.xlu0 %242
    %245 = vset.pattern.permute.xlu0 1
    %246 = vperm.xlu0 %245, %v52
    %v247 = vpop.permute.xlu0 %246
    %249 = vset.pattern.permute.xlu0 1
    %250 = vperm.xlu0 %249, %v53
    %v251 = vpop.permute.xlu0 %250
    %253 = vset.pattern.permute.xlu0 1
    %254 = vperm.xlu0 %253, %v54
    %v255 = vpop.permute.xlu0 %254
    %257 = vset.pattern.permute.xlu0 1
    %258 = vperm.xlu0 %257, %v55
    %v259 = vpop.permute.xlu0 %258
    %261 = vset.pattern.permute.xlu0 1
    %262 = vperm.xlu0 %261, %v56
    %v263 = vpop.permute.xlu0 %262
    %v265 = vperm.slane %v75, 1
    %v266 = vmul.f32 %v235, %v265
    %v267 = vmul.f32 %v239, %v265
    %v268 = vmul.f32 %v243, %v265
    %v269 = vmul.f32 %v247, %v265
    %v270 = vmul.f32 %v251, %v265
    %v271 = vmul.f32 %v255, %v265
    %v272 = vmul.f32 %v259, %v265
    %v273 = vmul.f32 %v263, %v265
    %v274 = vadd.f32 %v225, %v266
    %v275 = vadd.f32 %v226, %v267
    %v276 = vadd.f32 %v227, %v268
    %v277 = vadd.f32 %v228, %v269
    %v278 = vadd.f32 %v229, %v270
    %v279 = vadd.f32 %v230, %v271
    %v280 = vadd.f32 %v231, %v272
    %v281 = vadd.f32 %v232, %v273
    %vm282 = vcmask 523264
    %v284 = vsel %vm282, %v57, 0
    %v287 = vsel %vm282, %v58, 0
    %v290 = vsel %vm282, %v59, 0
    %v293 = vsel %vm282, %v60, 0
    %v296 = vsel %vm282, %v61, 0
    %v299 = vsel %vm282, %v62, 0
    %v302 = vsel %vm282, %v63, 0
    %v305 = vsel %vm282, %v64, 0
    %307 = vmatpush.msra.mxu0 0.0
    %308 = vmatpush.msra.mxu0 0.0
    %309 = vmatpush.msra.mxu0 0.0
    %310 = vmatpush.msra.mxu0 0.0
    %311 = vmatpush.msra.mxu0 0.0
    %312 = vmatpush.msra.mxu0 0.0
    %313 = vmatpush.msra.mxu0 0.0
    %314 = vmatpush.msra.mxu0 0.0
    %v315 = vand.u32 %v183, 4294901760
    %316 = vmatpush.msra.mxu0 %v315
    %v317 = vand.u32 %v182, 4294901760
    %318 = vmatpush.msra.mxu0 %v317
    %v319 = vand.u32 %v181, 4294901760
    %320 = vmatpush.msra.mxu0 %v319
    %v321 = vand.u32 %v180, 4294901760
    %322 = vmatpush.msra.mxu0 %v321
    %v323 = vand.u32 %v179, 4294901760
    %324 = vmatpush.msra.mxu0 %v323
    %v325 = vand.u32 %v178, 4294901760
    %326 = vmatpush.msra.mxu0 %v325
    %v327 = vand.u32 %v177, 4294901760
    %328 = vmatpush.msra.mxu0 %v327
    %v329 = vand.u32 %v176, 4294901760
    %330 = vmatpush.msra.mxu0 %v329
    %v331 = vand.u32 %v284, 4294901760
    %v332 = vsub.f32 %v284, %v331
    %v333 = vand.u32 %v332, 4294901760
    %v334 = vsub.f32 %v332, %v333
    %v335 = vand.u32 %v334, 4294901760
    %336 = vmatmul.f32.gmra.mxu0 %v335
    %v337 = vpop.f32.mrf.mxu0
    %v338 = vadd.f32 0.0, %v337
    %v339 = vand.u32 %v287, 4294901760
    %v340 = vsub.f32 %v287, %v339
    %v341 = vand.u32 %v340, 4294901760
    %v342 = vsub.f32 %v340, %v341
    %v343 = vand.u32 %v342, 4294901760
    %344 = vmatmul.f32.gmra.mxu0 %v343
    %v345 = vpop.f32.mrf.mxu0
    %v346 = vadd.f32 0.0, %v345
    %v347 = vand.u32 %v290, 4294901760
    %v348 = vsub.f32 %v290, %v347
    %v349 = vand.u32 %v348, 4294901760
    %v350 = vsub.f32 %v348, %v349
    %v351 = vand.u32 %v350, 4294901760
    %352 = vmatmul.f32.gmra.mxu0 %v351
    %v353 = vpop.f32.mrf.mxu0
    %v354 = vadd.f32 0.0, %v353
    %v355 = vand.u32 %v293, 4294901760
    %v356 = vsub.f32 %v293, %v355
    %v357 = vand.u32 %v356, 4294901760
    %v358 = vsub.f32 %v356, %v357
    %v359 = vand.u32 %v358, 4294901760
    %360 = vmatmul.f32.gmra.mxu0 %v359
    %v361 = vpop.f32.mrf.mxu0
    %v362 = vadd.f32 0.0, %v361
    %v363 = vand.u32 %v296, 4294901760
    %v364 = vsub.f32 %v296, %v363
    %v365 = vand.u32 %v364, 4294901760
    %v366 = vsub.f32 %v364, %v365
    %v367 = vand.u32 %v366, 4294901760
    %368 = vmatmul.f32.gmra.mxu0 %v367
    %v369 = vpop.f32.mrf.mxu0
    %v370 = vadd.f32 0.0, %v369
    %v371 = vand.u32 %v299, 4294901760
    %v372 = vsub.f32 %v299, %v371
    %v373 = vand.u32 %v372, 4294901760
    %v374 = vsub.f32 %v372, %v373
    %v375 = vand.u32 %v374, 4294901760
    %376 = vmatmul.f32.gmra.mxu0 %v375
    %v377 = vpop.f32.mrf.mxu0
    %v378 = vadd.f32 0.0, %v377
    %v379 = vand.u32 %v302, 4294901760
    %v380 = vsub.f32 %v302, %v379
    %v381 = vand.u32 %v380, 4294901760
    %v382 = vsub.f32 %v380, %v381
    %v383 = vand.u32 %v382, 4294901760
    %384 = vmatmul.f32.gmra.mxu0 %v383
    %v385 = vpop.f32.mrf.mxu0
    %v386 = vadd.f32 0.0, %v385
    %v387 = vand.u32 %v305, 4294901760
    %v388 = vsub.f32 %v305, %v387
    %v389 = vand.u32 %v388, 4294901760
    %v390 = vsub.f32 %v388, %v389
    %v391 = vand.u32 %v390, 4294901760
    %392 = vmatmul.f32.gmra.mxu0 %v391
    %v393 = vpop.f32.mrf.mxu0
    %v394 = vadd.f32 0.0, %v393
    %395 = vdwg.mxu0
    %396 = vmatpush.msra.mxu0 0.0
    %397 = vmatpush.msra.mxu0 0.0
    %398 = vmatpush.msra.mxu0 0.0
    %399 = vmatpush.msra.mxu0 0.0
    %400 = vmatpush.msra.mxu0 0.0
    %401 = vmatpush.msra.mxu0 0.0
    %402 = vmatpush.msra.mxu0 0.0
    %403 = vmatpush.msra.mxu0 0.0
    %v404 = vand.u32 %v183, 4294901760
    %v405 = vsub.f32 %v183, %v404
    %v406 = vand.u32 %v405, 4294901760
    %v407 = vsub.f32 %v405, %v406
    %v408 = vand.u32 %v407, 4294901760
    %409 = vmatpush.msra.mxu0 %v408
    %v410 = vand.u32 %v182, 4294901760
    %v411 = vsub.f32 %v182, %v410
    %v412 = vand.u32 %v411, 4294901760
    %v413 = vsub.f32 %v411, %v412
    %v414 = vand.u32 %v413, 4294901760
    %415 = vmatpush.msra.mxu0 %v414
    %v416 = vand.u32 %v181, 4294901760
    %v417 = vsub.f32 %v181, %v416
    %v418 = vand.u32 %v417, 4294901760
    %v419 = vsub.f32 %v417, %v418
    %v420 = vand.u32 %v419, 4294901760
    %421 = vmatpush.msra.mxu0 %v420
    %v422 = vand.u32 %v180, 4294901760
    %v423 = vsub.f32 %v180, %v422
    %v424 = vand.u32 %v423, 4294901760
    %v425 = vsub.f32 %v423, %v424
    %v426 = vand.u32 %v425, 4294901760
    %427 = vmatpush.msra.mxu0 %v426
    %v428 = vand.u32 %v179, 4294901760
    %v429 = vsub.f32 %v179, %v428
    %v430 = vand.u32 %v429, 4294901760
    %v431 = vsub.f32 %v429, %v430
    %v432 = vand.u32 %v431, 4294901760
    %433 = vmatpush.msra.mxu0 %v432
    %v434 = vand.u32 %v178, 4294901760
    %v435 = vsub.f32 %v178, %v434
    %v436 = vand.u32 %v435, 4294901760
    %v437 = vsub.f32 %v435, %v436
    %v438 = vand.u32 %v437, 4294901760
    %439 = vmatpush.msra.mxu0 %v438
    %v440 = vand.u32 %v177, 4294901760
    %v441 = vsub.f32 %v177, %v440
    %v442 = vand.u32 %v441, 4294901760
    %v443 = vsub.f32 %v441, %v442
    %v444 = vand.u32 %v443, 4294901760
    %445 = vmatpush.msra.mxu0 %v444
    %v446 = vand.u32 %v176, 4294901760
    %v447 = vsub.f32 %v176, %v446
    %v448 = vand.u32 %v447, 4294901760
    %v449 = vsub.f32 %v447, %v448
    %v450 = vand.u32 %v449, 4294901760
    %451 = vmatpush.msra.mxu0 %v450
    %v452 = vand.u32 %v284, 4294901760
    %453 = vmatmul.f32.gmra.mxu0 %v452
    %v454 = vpop.f32.mrf.mxu0
    %v455 = vadd.f32 %v338, %v454
    %v456 = vand.u32 %v287, 4294901760
    %457 = vmatmul.f32.gmra.mxu0 %v456
    %v458 = vpop.f32.mrf.mxu0
    %v459 = vadd.f32 %v346, %v458
    %v460 = vand.u32 %v290, 4294901760
    %461 = vmatmul.f32.gmra.mxu0 %v460
    %v462 = vpop.f32.mrf.mxu0
    %v463 = vadd.f32 %v354, %v462
    %v464 = vand.u32 %v293, 4294901760
    %465 = vmatmul.f32.gmra.mxu0 %v464
    %v466 = vpop.f32.mrf.mxu0
    %v467 = vadd.f32 %v362, %v466
    %v468 = vand.u32 %v296, 4294901760
    %469 = vmatmul.f32.gmra.mxu0 %v468
    %v470 = vpop.f32.mrf.mxu0
    %v471 = vadd.f32 %v370, %v470
    %v472 = vand.u32 %v299, 4294901760
    %473 = vmatmul.f32.gmra.mxu0 %v472
    %v474 = vpop.f32.mrf.mxu0
    %v475 = vadd.f32 %v378, %v474
    %v476 = vand.u32 %v302, 4294901760
    %477 = vmatmul.f32.gmra.mxu0 %v476
    %v478 = vpop.f32.mrf.mxu0
    %v479 = vadd.f32 %v386, %v478
    %v480 = vand.u32 %v305, 4294901760
    %481 = vmatmul.f32.gmra.mxu0 %v480
    %v482 = vpop.f32.mrf.mxu0
    %v483 = vadd.f32 %v394, %v482
    %484 = vdwg.mxu0
    %485 = vmatpush.msra.mxu0 0.0
    %486 = vmatpush.msra.mxu0 0.0
    %487 = vmatpush.msra.mxu0 0.0
    %488 = vmatpush.msra.mxu0 0.0
    %489 = vmatpush.msra.mxu0 0.0
    %490 = vmatpush.msra.mxu0 0.0
    %491 = vmatpush.msra.mxu0 0.0
    %492 = vmatpush.msra.mxu0 0.0
    %v493 = vand.u32 %v183, 4294901760
    %v494 = vsub.f32 %v183, %v493
    %495 = vmatpush.msra.mxu0 %v494
    %v496 = vand.u32 %v182, 4294901760
    %v497 = vsub.f32 %v182, %v496
    %498 = vmatpush.msra.mxu0 %v497
    %v499 = vand.u32 %v181, 4294901760
    %v500 = vsub.f32 %v181, %v499
    %501 = vmatpush.msra.mxu0 %v500
    %v502 = vand.u32 %v180, 4294901760
    %v503 = vsub.f32 %v180, %v502
    %504 = vmatpush.msra.mxu0 %v503
    %v505 = vand.u32 %v179, 4294901760
    %v506 = vsub.f32 %v179, %v505
    %507 = vmatpush.msra.mxu0 %v506
    %v508 = vand.u32 %v178, 4294901760
    %v509 = vsub.f32 %v178, %v508
    %510 = vmatpush.msra.mxu0 %v509
    %v511 = vand.u32 %v177, 4294901760
    %v512 = vsub.f32 %v177, %v511
    %513 = vmatpush.msra.mxu0 %v512
    %v514 = vand.u32 %v176, 4294901760
    %v515 = vsub.f32 %v176, %v514
    %516 = vmatpush.msra.mxu0 %v515
    %v517 = vand.u32 %v284, 4294901760
    %v518 = vsub.f32 %v284, %v517
    %519 = vmatmul.f32.gmra.mxu0 %v518
    %v520 = vpop.f32.mrf.mxu0
    %v521 = vadd.f32 %v455, %v520
    %v522 = vand.u32 %v287, 4294901760
    %v523 = vsub.f32 %v287, %v522
    %524 = vmatmul.f32.gmra.mxu0 %v523
    %v525 = vpop.f32.mrf.mxu0
    %v526 = vadd.f32 %v459, %v525
    %v527 = vand.u32 %v290, 4294901760
    %v528 = vsub.f32 %v290, %v527
    %529 = vmatmul.f32.gmra.mxu0 %v528
    %v530 = vpop.f32.mrf.mxu0
    %v531 = vadd.f32 %v463, %v530
    %v532 = vand.u32 %v293, 4294901760
    %v533 = vsub.f32 %v293, %v532
    %534 = vmatmul.f32.gmra.mxu0 %v533
    %v535 = vpop.f32.mrf.mxu0
    %v536 = vadd.f32 %v467, %v535
    %v537 = vand.u32 %v296, 4294901760
    %v538 = vsub.f32 %v296, %v537
    %539 = vmatmul.f32.gmra.mxu0 %v538
    %v540 = vpop.f32.mrf.mxu0
    %v541 = vadd.f32 %v471, %v540
    %v542 = vand.u32 %v299, 4294901760
    %v543 = vsub.f32 %v299, %v542
    %544 = vmatmul.f32.gmra.mxu0 %v543
    %v545 = vpop.f32.mrf.mxu0
    %v546 = vadd.f32 %v475, %v545
    %v547 = vand.u32 %v302, 4294901760
    %v548 = vsub.f32 %v302, %v547
    %549 = vmatmul.f32.gmra.mxu0 %v548
    %v550 = vpop.f32.mrf.mxu0
    %v551 = vadd.f32 %v479, %v550
    %v552 = vand.u32 %v305, 4294901760
    %v553 = vsub.f32 %v305, %v552
    %554 = vmatmul.f32.gmra.mxu0 %v553
    %v555 = vpop.f32.mrf.mxu0
    %v556 = vadd.f32 %v483, %v555
    %557 = vdwg.mxu0
    %558 = vmatpush.msra.mxu0 0.0
    %559 = vmatpush.msra.mxu0 0.0
    %560 = vmatpush.msra.mxu0 0.0
    %561 = vmatpush.msra.mxu0 0.0
    %562 = vmatpush.msra.mxu0 0.0
    %563 = vmatpush.msra.mxu0 0.0
    %564 = vmatpush.msra.mxu0 0.0
    %565 = vmatpush.msra.mxu0 0.0
    %v566 = vand.u32 %v183, 4294901760
    %567 = vmatpush.msra.mxu0 %v566
    %v568 = vand.u32 %v182, 4294901760
    %569 = vmatpush.msra.mxu0 %v568
    %v570 = vand.u32 %v181, 4294901760
    %571 = vmatpush.msra.mxu0 %v570
    %v572 = vand.u32 %v180, 4294901760
    %573 = vmatpush.msra.mxu0 %v572
    %v574 = vand.u32 %v179, 4294901760
    %575 = vmatpush.msra.mxu0 %v574
    %v576 = vand.u32 %v178, 4294901760
    %577 = vmatpush.msra.mxu0 %v576
    %v578 = vand.u32 %v177, 4294901760
    %579 = vmatpush.msra.mxu0 %v578
    %v580 = vand.u32 %v176, 4294901760
    %581 = vmatpush.msra.mxu0 %v580
    %v582 = vand.u32 %v284, 4294901760
    %v583 = vsub.f32 %v284, %v582
    %v584 = vand.u32 %v583, 4294901760
    %585 = vmatmul.f32.gmra.mxu0 %v584
    %v586 = vpop.f32.mrf.mxu0
    %v587 = vadd.f32 %v521, %v586
    %v588 = vand.u32 %v287, 4294901760
    %v589 = vsub.f32 %v287, %v588
    %v590 = vand.u32 %v589, 4294901760
    %591 = vmatmul.f32.gmra.mxu0 %v590
    %v592 = vpop.f32.mrf.mxu0
    %v593 = vadd.f32 %v526, %v592
    %v594 = vand.u32 %v290, 4294901760
    %v595 = vsub.f32 %v290, %v594
    %v596 = vand.u32 %v595, 4294901760
    %597 = vmatmul.f32.gmra.mxu0 %v596
    %v598 = vpop.f32.mrf.mxu0
    %v599 = vadd.f32 %v531, %v598
    %v600 = vand.u32 %v293, 4294901760
    %v601 = vsub.f32 %v293, %v600
    %v602 = vand.u32 %v601, 4294901760
    %603 = vmatmul.f32.gmra.mxu0 %v602
    %v604 = vpop.f32.mrf.mxu0
    %v605 = vadd.f32 %v536, %v604
    %v606 = vand.u32 %v296, 4294901760
    %v607 = vsub.f32 %v296, %v606
    %v608 = vand.u32 %v607, 4294901760
    %609 = vmatmul.f32.gmra.mxu0 %v608
    %v610 = vpop.f32.mrf.mxu0
    %v611 = vadd.f32 %v541, %v610
    %v612 = vand.u32 %v299, 4294901760
    %v613 = vsub.f32 %v299, %v612
    %v614 = vand.u32 %v613, 4294901760
    %615 = vmatmul.f32.gmra.mxu0 %v614
    %v616 = vpop.f32.mrf.mxu0
    %v617 = vadd.f32 %v546, %v616
    %v618 = vand.u32 %v302, 4294901760
    %v619 = vsub.f32 %v302, %v618
    %v620 = vand.u32 %v619, 4294901760
    %621 = vmatmul.f32.gmra.mxu0 %v620
    %v622 = vpop.f32.mrf.mxu0
    %v623 = vadd.f32 %v551, %v622
    %v624 = vand.u32 %v305, 4294901760
    %v625 = vsub.f32 %v305, %v624
    %v626 = vand.u32 %v625, 4294901760
    %627 = vmatmul.f32.gmra.mxu0 %v626
    %v628 = vpop.f32.mrf.mxu0
    %v629 = vadd.f32 %v556, %v628
    %630 = vdwg.mxu0
    %631 = vmatpush.msra.mxu0 0.0
    %632 = vmatpush.msra.mxu0 0.0
    %633 = vmatpush.msra.mxu0 0.0
    %634 = vmatpush.msra.mxu0 0.0
    %635 = vmatpush.msra.mxu0 0.0
    %636 = vmatpush.msra.mxu0 0.0
    %637 = vmatpush.msra.mxu0 0.0
    %638 = vmatpush.msra.mxu0 0.0
    %v639 = vand.u32 %v183, 4294901760
    %v640 = vsub.f32 %v183, %v639
    %v641 = vand.u32 %v640, 4294901760
    %642 = vmatpush.msra.mxu0 %v641
    %v643 = vand.u32 %v182, 4294901760
    %v644 = vsub.f32 %v182, %v643
    %v645 = vand.u32 %v644, 4294901760
    %646 = vmatpush.msra.mxu0 %v645
    %v647 = vand.u32 %v181, 4294901760
    %v648 = vsub.f32 %v181, %v647
    %v649 = vand.u32 %v648, 4294901760
    %650 = vmatpush.msra.mxu0 %v649
    %v651 = vand.u32 %v180, 4294901760
    %v652 = vsub.f32 %v180, %v651
    %v653 = vand.u32 %v652, 4294901760
    %654 = vmatpush.msra.mxu0 %v653
    %v655 = vand.u32 %v179, 4294901760
    %v656 = vsub.f32 %v179, %v655
    %v657 = vand.u32 %v656, 4294901760
    %658 = vmatpush.msra.mxu0 %v657
    %v659 = vand.u32 %v178, 4294901760
    %v660 = vsub.f32 %v178, %v659
    %v661 = vand.u32 %v660, 4294901760
    %662 = vmatpush.msra.mxu0 %v661
    %v663 = vand.u32 %v177, 4294901760
    %v664 = vsub.f32 %v177, %v663
    %v665 = vand.u32 %v664, 4294901760
    %666 = vmatpush.msra.mxu0 %v665
    %v667 = vand.u32 %v176, 4294901760
    %v668 = vsub.f32 %v176, %v667
    %v669 = vand.u32 %v668, 4294901760
    %670 = vmatpush.msra.mxu0 %v669
    %v671 = vand.u32 %v284, 4294901760
    %672 = vmatmul.f32.gmra.mxu0 %v671
    %v673 = vpop.f32.mrf.mxu0
    %v674 = vadd.f32 %v587, %v673
    %v675 = vand.u32 %v287, 4294901760
    %676 = vmatmul.f32.gmra.mxu0 %v675
    %v677 = vpop.f32.mrf.mxu0
    %v678 = vadd.f32 %v593, %v677
    %v679 = vand.u32 %v290, 4294901760
    %680 = vmatmul.f32.gmra.mxu0 %v679
    %v681 = vpop.f32.mrf.mxu0
    %v682 = vadd.f32 %v599, %v681
    %v683 = vand.u32 %v293, 4294901760
    %684 = vmatmul.f32.gmra.mxu0 %v683
    %v685 = vpop.f32.mrf.mxu0
    %v686 = vadd.f32 %v605, %v685
    %v687 = vand.u32 %v296, 4294901760
    %688 = vmatmul.f32.gmra.mxu0 %v687
    %v689 = vpop.f32.mrf.mxu0
    %v690 = vadd.f32 %v611, %v689
    %v691 = vand.u32 %v299, 4294901760
    %692 = vmatmul.f32.gmra.mxu0 %v691
    %v693 = vpop.f32.mrf.mxu0
    %v694 = vadd.f32 %v617, %v693
    %v695 = vand.u32 %v302, 4294901760
    %696 = vmatmul.f32.gmra.mxu0 %v695
    %v697 = vpop.f32.mrf.mxu0
    %v698 = vadd.f32 %v623, %v697
    %v699 = vand.u32 %v305, 4294901760
    %700 = vmatmul.f32.gmra.mxu0 %v699
    %v701 = vpop.f32.mrf.mxu0
    %v702 = vadd.f32 %v629, %v701
    %703 = vdwg.mxu0
    %704 = vmatpush.msra.mxu0 0.0
    %705 = vmatpush.msra.mxu0 0.0
    %706 = vmatpush.msra.mxu0 0.0
    %707 = vmatpush.msra.mxu0 0.0
    %708 = vmatpush.msra.mxu0 0.0
    %709 = vmatpush.msra.mxu0 0.0
    %710 = vmatpush.msra.mxu0 0.0
    %711 = vmatpush.msra.mxu0 0.0
    %v712 = vand.u32 %v183, 4294901760
    %713 = vmatpush.msra.mxu0 %v712
    %v714 = vand.u32 %v182, 4294901760
    %715 = vmatpush.msra.mxu0 %v714
    %v716 = vand.u32 %v181, 4294901760
    %717 = vmatpush.msra.mxu0 %v716
    %v718 = vand.u32 %v180, 4294901760
    %719 = vmatpush.msra.mxu0 %v718
    %v720 = vand.u32 %v179, 4294901760
    %721 = vmatpush.msra.mxu0 %v720
    %v722 = vand.u32 %v178, 4294901760
    %723 = vmatpush.msra.mxu0 %v722
    %v724 = vand.u32 %v177, 4294901760
    %725 = vmatpush.msra.mxu0 %v724
    %v726 = vand.u32 %v176, 4294901760
    %727 = vmatpush.msra.mxu0 %v726
    %v728 = vand.u32 %v284, 4294901760
    %729 = vmatmul.f32.gmra.mxu0 %v728
    %v730 = vpop.f32.mrf.mxu0
    %v731 = vadd.f32 %v674, %v730
    %v732 = vand.u32 %v287, 4294901760
    %733 = vmatmul.f32.gmra.mxu0 %v732
    %v734 = vpop.f32.mrf.mxu0
    %v735 = vadd.f32 %v678, %v734
    %v736 = vand.u32 %v290, 4294901760
    %737 = vmatmul.f32.gmra.mxu0 %v736
    %v738 = vpop.f32.mrf.mxu0
    %v739 = vadd.f32 %v682, %v738
    %v740 = vand.u32 %v293, 4294901760
    %741 = vmatmul.f32.gmra.mxu0 %v740
    %v742 = vpop.f32.mrf.mxu0
    %v743 = vadd.f32 %v686, %v742
    %v744 = vand.u32 %v296, 4294901760
    %745 = vmatmul.f32.gmra.mxu0 %v744
    %v746 = vpop.f32.mrf.mxu0
    %v747 = vadd.f32 %v690, %v746
    %v748 = vand.u32 %v299, 4294901760
    %749 = vmatmul.f32.gmra.mxu0 %v748
    %v750 = vpop.f32.mrf.mxu0
    %v751 = vadd.f32 %v694, %v750
    %v752 = vand.u32 %v302, 4294901760
    %753 = vmatmul.f32.gmra.mxu0 %v752
    %v754 = vpop.f32.mrf.mxu0
    %v755 = vadd.f32 %v698, %v754
    %v756 = vand.u32 %v305, 4294901760
    %757 = vmatmul.f32.gmra.mxu0 %v756
    %v758 = vpop.f32.mrf.mxu0
    %v759 = vadd.f32 %v702, %v758
    %760 = vdwg.mxu0
    %v761 = vadd.f32 %v274, %v731
    %v762 = vadd.f32 %v275, %v735
    %v763 = vadd.f32 %v276, %v739
    %v764 = vadd.f32 %v277, %v743
    %v765 = vadd.f32 %v278, %v747
    %v766 = vadd.f32 %v279, %v751
    %v767 = vadd.f32 %v280, %v755
    %v768 = vadd.f32 %v281, %v759
    %770 = vset.pattern.permute.xlu0 0
    %771 = vperm.xlu0 %770, %v65
    %v772 = vpop.permute.xlu0 %771
    %775 = vset.pattern.permute.xlu0 0
    %776 = vperm.xlu0 %775, %v66
    %v777 = vpop.permute.xlu0 %776
    %780 = vset.pattern.permute.xlu0 0
    %781 = vperm.xlu0 %780, %v67
    %v782 = vpop.permute.xlu0 %781
    %785 = vset.pattern.permute.xlu0 0
    %786 = vperm.xlu0 %785, %v68
    %v787 = vpop.permute.xlu0 %786
    %790 = vset.pattern.permute.xlu0 0
    %791 = vperm.xlu0 %790, %v69
    %v792 = vpop.permute.xlu0 %791
    %795 = vset.pattern.permute.xlu0 0
    %796 = vperm.xlu0 %795, %v70
    %v797 = vpop.permute.xlu0 %796
    %800 = vset.pattern.permute.xlu0 0
    %801 = vperm.xlu0 %800, %v71
    %v802 = vpop.permute.xlu0 %801
    %805 = vset.pattern.permute.xlu0 0
    %806 = vperm.xlu0 %805, %v72
    %v807 = vpop.permute.xlu0 %806
    %v809 = vadd.f32 %v761, %v772
    %v810 = vadd.f32 %v762, %v777
    %v811 = vadd.f32 %v763, %v782
    %v812 = vadd.f32 %v764, %v787
    %v813 = vadd.f32 %v765, %v792
    %v814 = vadd.f32 %v766, %v797
    %v815 = vadd.f32 %v767, %v802
    %v816 = vadd.f32 %v768, %v807
    %v817 = vtanh.pop %v809
    %v818 = vtanh.pop %v810
    %v819 = vtanh.pop %v811
    %v820 = vtanh.pop %v812
    %v821 = vtanh.pop %v813
    %v822 = vtanh.pop %v814
    %v823 = vtanh.pop %v815
    %v824 = vtanh.pop %v816
    %826 = vset.pattern.permute.xlu0 0
    %827 = vperm.xlu0 %826, %v74
    %v828 = vpop.permute.xlu0 %827
    %v831 = vsel %vm282, %v73, 0
    %833 = vmatpush.msra.mxu0 0.0
    %834 = vmatpush.msra.mxu0 0.0
    %835 = vmatpush.msra.mxu0 0.0
    %836 = vmatpush.msra.mxu0 0.0
    %837 = vmatpush.msra.mxu0 0.0
    %838 = vmatpush.msra.mxu0 0.0
    %839 = vmatpush.msra.mxu0 0.0
    %840 = vmatpush.msra.mxu0 0.0
    %v841 = vand.u32 %v824, 4294901760
    %842 = vmatpush.msra.mxu0 %v841
    %v843 = vand.u32 %v823, 4294901760
    %844 = vmatpush.msra.mxu0 %v843
    %v845 = vand.u32 %v822, 4294901760
    %846 = vmatpush.msra.mxu0 %v845
    %v847 = vand.u32 %v821, 4294901760
    %848 = vmatpush.msra.mxu0 %v847
    %v849 = vand.u32 %v820, 4294901760
    %850 = vmatpush.msra.mxu0 %v849
    %v851 = vand.u32 %v819, 4294901760
    %852 = vmatpush.msra.mxu0 %v851
    %v853 = vand.u32 %v818, 4294901760
    %854 = vmatpush.msra.mxu0 %v853
    %v855 = vand.u32 %v817, 4294901760
    %856 = vmatpush.msra.mxu0 %v855
    %v857 = vand.u32 %v831, 4294901760
    %v858 = vsub.f32 %v831, %v857
    %v859 = vand.u32 %v858, 4294901760
    %v860 = vsub.f32 %v858, %v859
    %v861 = vand.u32 %v860, 4294901760
    %862 = vmatmul.f32.gmra.mxu0 %v861
    %v863 = vpop.f32.mrf.mxu0
    %v864 = vadd.f32 %v828, %v863
    %865 = vdwg.mxu0
    %866 = vmatpush.msra.mxu0 0.0
    %867 = vmatpush.msra.mxu0 0.0
    %868 = vmatpush.msra.mxu0 0.0
    %869 = vmatpush.msra.mxu0 0.0
    %870 = vmatpush.msra.mxu0 0.0
    %871 = vmatpush.msra.mxu0 0.0
    %872 = vmatpush.msra.mxu0 0.0
    %873 = vmatpush.msra.mxu0 0.0
    %v874 = vand.u32 %v824, 4294901760
    %v875 = vsub.f32 %v824, %v874
    %v876 = vand.u32 %v875, 4294901760
    %v877 = vsub.f32 %v875, %v876
    %v878 = vand.u32 %v877, 4294901760
    %879 = vmatpush.msra.mxu0 %v878
    %v880 = vand.u32 %v823, 4294901760
    %v881 = vsub.f32 %v823, %v880
    %v882 = vand.u32 %v881, 4294901760
    %v883 = vsub.f32 %v881, %v882
    %v884 = vand.u32 %v883, 4294901760
    %885 = vmatpush.msra.mxu0 %v884
    %v886 = vand.u32 %v822, 4294901760
    %v887 = vsub.f32 %v822, %v886
    %v888 = vand.u32 %v887, 4294901760
    %v889 = vsub.f32 %v887, %v888
    %v890 = vand.u32 %v889, 4294901760
    %891 = vmatpush.msra.mxu0 %v890
    %v892 = vand.u32 %v821, 4294901760
    %v893 = vsub.f32 %v821, %v892
    %v894 = vand.u32 %v893, 4294901760
    %v895 = vsub.f32 %v893, %v894
    %v896 = vand.u32 %v895, 4294901760
    %897 = vmatpush.msra.mxu0 %v896
    %v898 = vand.u32 %v820, 4294901760
    %v899 = vsub.f32 %v820, %v898
    %v900 = vand.u32 %v899, 4294901760
    %v901 = vsub.f32 %v899, %v900
    %v902 = vand.u32 %v901, 4294901760
    %903 = vmatpush.msra.mxu0 %v902
    %v904 = vand.u32 %v819, 4294901760
    %v905 = vsub.f32 %v819, %v904
    %v906 = vand.u32 %v905, 4294901760
    %v907 = vsub.f32 %v905, %v906
    %v908 = vand.u32 %v907, 4294901760
    %909 = vmatpush.msra.mxu0 %v908
    %v910 = vand.u32 %v818, 4294901760
    %v911 = vsub.f32 %v818, %v910
    %v912 = vand.u32 %v911, 4294901760
    %v913 = vsub.f32 %v911, %v912
    %v914 = vand.u32 %v913, 4294901760
    %915 = vmatpush.msra.mxu0 %v914
    %v916 = vand.u32 %v817, 4294901760
    %v917 = vsub.f32 %v817, %v916
    %v918 = vand.u32 %v917, 4294901760
    %v919 = vsub.f32 %v917, %v918
    %v920 = vand.u32 %v919, 4294901760
    %921 = vmatpush.msra.mxu0 %v920
    %v922 = vand.u32 %v831, 4294901760
    %923 = vmatmul.f32.gmra.mxu0 %v922
    %v924 = vpop.f32.mrf.mxu0
    %v925 = vadd.f32 %v864, %v924
    %926 = vdwg.mxu0
    %927 = vmatpush.msra.mxu0 0.0
    %928 = vmatpush.msra.mxu0 0.0
    %929 = vmatpush.msra.mxu0 0.0
    %930 = vmatpush.msra.mxu0 0.0
    %931 = vmatpush.msra.mxu0 0.0
    %932 = vmatpush.msra.mxu0 0.0
    %933 = vmatpush.msra.mxu0 0.0
    %934 = vmatpush.msra.mxu0 0.0
    %v935 = vand.u32 %v824, 4294901760
    %v936 = vsub.f32 %v824, %v935
    %937 = vmatpush.msra.mxu0 %v936
    %v938 = vand.u32 %v823, 4294901760
    %v939 = vsub.f32 %v823, %v938
    %940 = vmatpush.msra.mxu0 %v939
    %v941 = vand.u32 %v822, 4294901760
    %v942 = vsub.f32 %v822, %v941
    %943 = vmatpush.msra.mxu0 %v942
    %v944 = vand.u32 %v821, 4294901760
    %v945 = vsub.f32 %v821, %v944
    %946 = vmatpush.msra.mxu0 %v945
    %v947 = vand.u32 %v820, 4294901760
    %v948 = vsub.f32 %v820, %v947
    %949 = vmatpush.msra.mxu0 %v948
    %v950 = vand.u32 %v819, 4294901760
    %v951 = vsub.f32 %v819, %v950
    %952 = vmatpush.msra.mxu0 %v951
    %v953 = vand.u32 %v818, 4294901760
    %v954 = vsub.f32 %v818, %v953
    %955 = vmatpush.msra.mxu0 %v954
    %v956 = vand.u32 %v817, 4294901760
    %v957 = vsub.f32 %v817, %v956
    %958 = vmatpush.msra.mxu0 %v957
    %v959 = vand.u32 %v831, 4294901760
    %v960 = vsub.f32 %v831, %v959
    %961 = vmatmul.f32.gmra.mxu0 %v960
    %v962 = vpop.f32.mrf.mxu0
    %v963 = vadd.f32 %v925, %v962
    %964 = vdwg.mxu0
    %965 = vmatpush.msra.mxu0 0.0
    %966 = vmatpush.msra.mxu0 0.0
    %967 = vmatpush.msra.mxu0 0.0
    %968 = vmatpush.msra.mxu0 0.0
    %969 = vmatpush.msra.mxu0 0.0
    %970 = vmatpush.msra.mxu0 0.0
    %971 = vmatpush.msra.mxu0 0.0
    %972 = vmatpush.msra.mxu0 0.0
    %v973 = vand.u32 %v824, 4294901760
    %974 = vmatpush.msra.mxu0 %v973
    %v975 = vand.u32 %v823, 4294901760
    %976 = vmatpush.msra.mxu0 %v975
    %v977 = vand.u32 %v822, 4294901760
    %978 = vmatpush.msra.mxu0 %v977
    %v979 = vand.u32 %v821, 4294901760
    %980 = vmatpush.msra.mxu0 %v979
    %v981 = vand.u32 %v820, 4294901760
    %982 = vmatpush.msra.mxu0 %v981
    %v983 = vand.u32 %v819, 4294901760
    %984 = vmatpush.msra.mxu0 %v983
    %v985 = vand.u32 %v818, 4294901760
    %986 = vmatpush.msra.mxu0 %v985
    %v987 = vand.u32 %v817, 4294901760
    %988 = vmatpush.msra.mxu0 %v987
    %v989 = vand.u32 %v831, 4294901760
    %v990 = vsub.f32 %v831, %v989
    %v991 = vand.u32 %v990, 4294901760
    %992 = vmatmul.f32.gmra.mxu0 %v991
    %v993 = vpop.f32.mrf.mxu0
    %v994 = vadd.f32 %v963, %v993
    %995 = vdwg.mxu0
    %996 = vmatpush.msra.mxu0 0.0
    %997 = vmatpush.msra.mxu0 0.0
    %998 = vmatpush.msra.mxu0 0.0
    %999 = vmatpush.msra.mxu0 0.0
    %1000 = vmatpush.msra.mxu0 0.0
    %1001 = vmatpush.msra.mxu0 0.0
    %1002 = vmatpush.msra.mxu0 0.0
    %1003 = vmatpush.msra.mxu0 0.0
    %v1004 = vand.u32 %v824, 4294901760
    %v1005 = vsub.f32 %v824, %v1004
    %v1006 = vand.u32 %v1005, 4294901760
    %1007 = vmatpush.msra.mxu0 %v1006
    %v1008 = vand.u32 %v823, 4294901760
    %v1009 = vsub.f32 %v823, %v1008
    %v1010 = vand.u32 %v1009, 4294901760
    %1011 = vmatpush.msra.mxu0 %v1010
    %v1012 = vand.u32 %v822, 4294901760
    %v1013 = vsub.f32 %v822, %v1012
    %v1014 = vand.u32 %v1013, 4294901760
    %1015 = vmatpush.msra.mxu0 %v1014
    %v1016 = vand.u32 %v821, 4294901760
    %v1017 = vsub.f32 %v821, %v1016
    %v1018 = vand.u32 %v1017, 4294901760
    %1019 = vmatpush.msra.mxu0 %v1018
    %v1020 = vand.u32 %v820, 4294901760
    %v1021 = vsub.f32 %v820, %v1020
    %v1022 = vand.u32 %v1021, 4294901760
    %1023 = vmatpush.msra.mxu0 %v1022
    %v1024 = vand.u32 %v819, 4294901760
    %v1025 = vsub.f32 %v819, %v1024
    %v1026 = vand.u32 %v1025, 4294901760
    %1027 = vmatpush.msra.mxu0 %v1026
    %v1028 = vand.u32 %v818, 4294901760
    %v1029 = vsub.f32 %v818, %v1028
    %v1030 = vand.u32 %v1029, 4294901760
    %1031 = vmatpush.msra.mxu0 %v1030
    %v1032 = vand.u32 %v817, 4294901760
    %v1033 = vsub.f32 %v817, %v1032
    %v1034 = vand.u32 %v1033, 4294901760
    %1035 = vmatpush.msra.mxu0 %v1034
    %v1036 = vand.u32 %v831, 4294901760
    %1037 = vmatmul.f32.gmra.mxu0 %v1036
    %v1038 = vpop.f32.mrf.mxu0
    %v1039 = vadd.f32 %v994, %v1038
    %1040 = vdwg.mxu0
    %1041 = vmatpush.msra.mxu0 0.0
    %1042 = vmatpush.msra.mxu0 0.0
    %1043 = vmatpush.msra.mxu0 0.0
    %1044 = vmatpush.msra.mxu0 0.0
    %1045 = vmatpush.msra.mxu0 0.0
    %1046 = vmatpush.msra.mxu0 0.0
    %1047 = vmatpush.msra.mxu0 0.0
    %1048 = vmatpush.msra.mxu0 0.0
    %v1049 = vand.u32 %v824, 4294901760
    %1050 = vmatpush.msra.mxu0 %v1049
    %v1051 = vand.u32 %v823, 4294901760
    %1052 = vmatpush.msra.mxu0 %v1051
    %v1053 = vand.u32 %v822, 4294901760
    %1054 = vmatpush.msra.mxu0 %v1053
    %v1055 = vand.u32 %v821, 4294901760
    %1056 = vmatpush.msra.mxu0 %v1055
    %v1057 = vand.u32 %v820, 4294901760
    %1058 = vmatpush.msra.mxu0 %v1057
    %v1059 = vand.u32 %v819, 4294901760
    %1060 = vmatpush.msra.mxu0 %v1059
    %v1061 = vand.u32 %v818, 4294901760
    %1062 = vmatpush.msra.mxu0 %v1061
    %v1063 = vand.u32 %v817, 4294901760
    %1064 = vmatpush.msra.mxu0 %v1063
    %v1065 = vand.u32 %v831, 4294901760
    %1066 = vmatmul.f32.gmra.mxu0 %v1065
    %v1067 = vpop.f32.mrf.mxu0
    %v1068 = vadd.f32 %v1039, %v1067
    %1069 = vdwg.mxu0
    %1070 = vst [vmem:[#allocation2] sm:$0x3] %v1068
    // Predicated region
    $region38: #{tpu_custom_call.1} parent=1 // pred_check
      _
    $region39: #{tpu_custom_call.1} parent=1 // pred_check_branch
      %1072 = sbr.rel (0) target = $region41
    $region40: #{tpu_custom_call.1} parent=1 // pred_region
      %1074 = vsyncadd [#allocation3], 0
      %s1076 = sshll.u32 [#allocation2], 4
      %s1077 = int_to_ptr.vmem [resolvable:$true] %s1076
      %s1078 = sshll.u32 %s9, 4
      %s1079 = int_to_ptr.hbm [resolvable:$true] %s1078
      %1081 = dma.vmem_to_hbm [thread:$0]  %s1077, 32, %s1079, [#allocation3]
    $region41: #{tpu_custom_call.1} parent=1 // pred_fallthru
      _
    // Predicated region
    $region42: #{tpu_custom_call.1} parent=1 // pred_check
      _
    $region43: #{tpu_custom_call.1} parent=1 // pred_check_branch
      %1083 = sbr.rel (0) target = $region45
    $region44: #{tpu_custom_call.1} parent=1 // pred_region
      %1085 = dma.done [#allocation3], 32
    $region45: #{tpu_custom_call.1} parent=1 // pred_fallthru
      _
    %1086 = vsyncpa [#allocation3], 1

</llo_original>
